<compile_context>
chip_gen: v7x
topology: tpu7x:2x2x1
jax: 0.10.0
libtpu: 0.0.40
codegen_flags: <defaults>
</compile_context>

<pallas_src>
import functools

import jax
import jax.numpy as jnp
from jax.experimental import pallas as pl
from jax.experimental.pallas import tpu as pltpu

LANE = 128
SUB = 8


def _round_up(n: int, m: int) -> int:
    return ((n + m - 1) // m) * m


def _soft_policy_kernel(
    x_ref,        # [Bt, Din_p]   (bf16, Din_p = round_up(Din, 8))
    w_in_ref,     # [Din_p, H_p]  (bf16, resident)
    w_hid_ref,    # [L, H_p, H_p] (bf16, resident)
    w_head_ref,   # [H_p, 2*A_p]  (bf16, resident; [mean | log_std], lane-aligned)
    b_ref,        # [L+2, Hb]     (f32; row 0: b_in, 1..L: b_hid, L+1: b_head)
    out_ref,      # [Bt, 2*A_p]   (f32, lane-dense)
    *,
    a_pad: int,
    log_std_min: float,
    log_std_max: float,
):
    num_layers = w_hid_ref.shape[0]
    hp = w_in_ref.shape[1]          # padded hidden width (multiple of 128)
    a2p = 2 * a_pad                 # fused head width (multiple of 128)
    wdtype = w_in_ref.dtype

    def linear(h, w, bias_row, width):
        acc = jnp.dot(h, w, preferred_element_type=jnp.float32)
        return acc + b_ref[bias_row:bias_row + 1, :width]

    # Input linear (no activation after it, matching the nn.Sequential).
    h = linear(x_ref[...], w_in_ref[...], 0, hp)

    # Hidden stack: Linear -> ReLU -> Dropout (identity in eval mode).
    for l in range(num_layers):
        h = linear(h.astype(wdtype), w_hid_ref[l], l + 1, hp)
        h = jnp.maximum(h, 0.0)
        # TODO(synk): training-mode dropout masking not implemented.

    # Fused, lane-aligned head: cols [0, A_p) = mean, [A_p, 2A_p) = log_std.
    y = linear(h.astype(wdtype), w_head_ref[...], num_layers + 1, a2p)
    out_ref[:, :a_pad] = y[:, :a_pad].astype(out_ref.dtype)
    out_ref[:, a_pad:] = jnp.clip(
        y[:, a_pad:], log_std_min, log_std_max).astype(out_ref.dtype)


def prepare_params(params, dtype=jnp.bfloat16):
    """One-time packing of the SoftPolicyNetwork weights for the kernel.

    Fuses the two heads, pads all feature dims to 128 lanes (input features
    only to 8 sublanes), packs all biases into one f32 slab, and casts the
    matmul operands to `dtype` (bf16 by default for the MXU).
    """
    (w_in, b_in, w_hid, b_hid, w_mean, b_mean, w_lstd, b_lstd) = params
    Din, H = w_in.shape
    L = w_hid.shape[0]
    A = w_mean.shape[1]

    Din_p = _round_up(Din, SUB)     # streamed contraction width (sublane only)
    H_p = _round_up(H, LANE)
    A_p = _round_up(A, LANE)
    Hb = max(H_p, 2 * A_p)

    def pad2(a, rows, cols):
        return jnp.pad(a, ((0, rows - a.shape[0]), (0, cols - a.shape[1])))

    w_in_p = pad2(w_in, Din_p, H_p).astype(dtype)
    w_hid_p = jnp.pad(w_hid, ((0, 0), (0, H_p - H), (0, H_p - H))).astype(dtype)
    w_head = jnp.concatenate(
        [pad2(w_mean, H, A_p), pad2(w_lstd, H, A_p)], axis=1)        # [H, 2A_p]
    w_head_p = pad2(w_head, H_p, 2 * A_p).astype(dtype)

    b_in_r = jnp.pad(b_in.reshape(1, H), ((0, 0), (0, Hb - H)))
    b_hid_r = jnp.pad(b_hid.reshape(L, H), ((0, 0), (0, Hb - H)))
    b_head = jnp.concatenate(
        [jnp.pad(b_mean.reshape(1, A), ((0, 0), (0, A_p - A))),
         jnp.pad(b_lstd.reshape(1, A), ((0, 0), (0, A_p - A)))], axis=1)
    b_head_r = jnp.pad(b_head, ((0, 0), (0, Hb - 2 * A_p)))
    b_all = jnp.concatenate([b_in_r, b_hid_r, b_head_r], axis=0)     # [L+2, Hb]
    b_all = b_all.astype(jnp.float32)

    meta = dict(num_inputs=Din, hidden_dim=H, num_actions=A, num_layers=L,
                din_p=Din_p, h_p=H_p, a_p=A_p, hb=Hb)
    return (w_in_p, w_hid_p, w_head_p, b_all), meta


def soft_policy_forward(state, packed_params, meta, *, log_std_min=-20.0,
                        log_std_max=2.0, batch_tile=1024):
    """Runs the SoftPolicyNetwork forward pass via one gridded Pallas call."""
    w_in_p, w_hid_p, w_head_p, b_all = packed_params
    Din = meta["num_inputs"]
    A = meta["num_actions"]
    L = meta["num_layers"]
    Din_p, H_p, A_p, Hb = meta["din_p"], meta["h_p"], meta["a_p"], meta["hb"]
    A2_p = 2 * A_p
    wdtype = w_in_p.dtype
    witem = jnp.dtype(wdtype).itemsize

    B = state.shape[0]
    B_r = _round_up(B, SUB)
    # Keep >=2 grid steps whenever possible so the "parallel" batch axis can
    # shard across both TensorCores on v7x (harmless on single-TC v5e/v6e).
    bt = min(batch_tile, B_r)
    if B_r > SUB:
        bt = min(bt, _round_up(pl.cdiv(B_r, 2), SUB))
    bt = max(SUB, _round_up(bt, SUB))
    B_p = _round_up(B_r, bt)
    grid = (B_p // bt,)

    # Only the activation tile is padded per call (cheap: [B, Din] -> [B_p, Din_p]).
    x_p = jnp.pad(state.astype(wdtype), ((0, B_p - B), (0, Din_p - Din)))

    kernel = functools.partial(
        _soft_policy_kernel,
        a_pad=A_p,
        log_std_min=float(log_std_min),
        log_std_max=float(log_std_max),
    )

    # VMEM budget: single-buffered resident weights + double-buffered x/out
    # streams + f32 hidden intermediates, capped by the device capacity.
    weight_bytes = ((Din_p * H_p + L * H_p * H_p + H_p * A2_p) * witem
                    + (L + 2) * Hb * 4)
    stream_bytes = 2 * bt * (Din_p * witem + A2_p * 4)
    hidden_bytes = 2 * bt * H_p * 4
    want = weight_bytes + stream_bytes + hidden_bytes + (4 << 20)
    try:
        cap = int(pltpu.get_tpu_info().vmem_capacity_bytes) - (8 << 20)
    except Exception:
        cap = 56 << 20      # conservative: v7x has 64 MiB VMEM per TensorCore
    vmem_limit = int(max(min(want, cap), 16 << 20))

    flops = 2 * B_p * (Din_p * H_p + L * H_p * H_p + H_p * A2_p)
    bytes_accessed = weight_bytes + B_p * Din_p * witem + B_p * A2_p * 4

    def resident(shape, imap):
        # Constant index map -> keep a single VMEM buffer (no double-buffering).
        return pl.BlockSpec(shape, imap, pipeline_mode=pl.Buffered(1))

    out = pl.pallas_call(
        kernel,
        out_shape=jax.ShapeDtypeStruct((B_p, A2_p), jnp.float32),
        grid_spec=pltpu.PrefetchScalarGridSpec(
            num_scalar_prefetch=0,
            grid=grid,
            in_specs=[
                pl.BlockSpec((bt, Din_p), lambda i: (i, 0)),        # streamed x
                resident((Din_p, H_p), lambda i: (0, 0)),           # w_in
                resident((L, H_p, H_p), lambda i: (0, 0, 0)),       # w_hid
                resident((H_p, A2_p), lambda i: (0, 0)),            # fused head
                resident((L + 2, Hb), lambda i: (0, 0)),            # bias slab
            ],
            out_specs=pl.BlockSpec((bt, A2_p), lambda i: (i, 0)),
        ),
        compiler_params=pltpu.CompilerParams(
            dimension_semantics=("parallel",),
            vmem_limit_bytes=vmem_limit,
        ),
        cost_estimate=pl.CostEstimate(
            flops=flops, transcendentals=0, bytes_accessed=bytes_accessed),
    )(x_p, w_in_p, w_hid_p, w_head_p, b_all)

    mean = out[:B, :A]
    log_std = out[:B, A_p:A_p + A]
    return mean, log_std


def init_params(key, num_inputs, num_actions, hidden_dim, num_layers,
                init_w=0.003):
    """Deterministic uniform(-init_w, init_w) init, matching the PyTorch module."""
    def u(k, shape):
        return jax.random.uniform(k, shape, jnp.float32, -init_w, init_w)

    keys = jax.random.split(key, 8)
    w_in = u(keys[0], (num_inputs, hidden_dim))
    b_in = u(keys[1], (hidden_dim,))
    w_hid = u(keys[2], (num_layers, hidden_dim, hidden_dim))
    b_hid = u(keys[3], (num_layers, hidden_dim))
    w_mean = u(keys[4], (hidden_dim, num_actions))
    b_mean = u(keys[5], (num_actions,))
    w_lstd = u(keys[6], (hidden_dim, num_actions))
    b_lstd = u(keys[7], (num_actions,))
    return (w_in, b_in, w_hid, b_hid, w_mean, b_mean, w_lstd, b_lstd)


def reference_forward(state, params, log_std_min=-20.0, log_std_max=2.0):
    (w_in, b_in, w_hid, b_hid, w_mean, b_mean, w_lstd, b_lstd) = params
    h = state @ w_in + b_in
    for l in range(w_hid.shape[0]):
        h = jnp.maximum(h @ w_hid[l] + b_hid[l], 0.0)
    mean = h @ w_mean + b_mean
    log_std = jnp.clip(h @ w_lstd + b_lstd, log_std_min, log_std_max)
    return mean, log_std


if __name__ == "__main__":
    # Small shapes consistent with the module's forward.
    batch = 2
    num_inputs = 16
    num_actions = 4
    hidden_dim = 32
    num_layers = 6

    key = jax.random.PRNGKey(0)
    k_state, k_params = jax.random.split(key)
    state = jax.random.normal(k_state, (batch, num_inputs), jnp.float32)
    params = init_params(k_params, num_inputs, num_actions, hidden_dim,
                         num_layers)

    # One-time packing (hoisted out of the forward path), bf16 operands.
    packed, meta = prepare_params(params, dtype=jnp.bfloat16)
    packed = jax.block_until_ready(packed)

    mean, log_std = soft_policy_forward(state, packed, meta)
    jax.block_until_ready((mean, log_std))

    # Sanity check against a pure-JAX f32 reference (bf16 operands => relaxed tol).
    ref_mean, ref_log_std = reference_forward(state, params)
    assert mean.shape == ref_mean.shape and log_std.shape == ref_log_std.shape
    assert jnp.allclose(mean, ref_mean, atol=2e-3, rtol=2e-2)
    assert jnp.allclose(log_std, ref_log_std, atol=2e-3, rtol=2e-2)

    print("KERNEL_OK")
</pallas_src>

<mosaic_0001>
module attributes {stable_mosaic.version = 11 : i64} {
  func.func @_soft_policy_kernel(%arg0: i32, %arg1: memref<8x16xbf16, #tpu.memory_space<vmem>>, %arg2: memref<16x128xbf16, #tpu.memory_space<vmem>>, %arg3: memref<6x128x128xbf16, #tpu.memory_space<vmem>>, %arg4: memref<128x256xbf16, #tpu.memory_space<vmem>>, %arg5: memref<8x256xf32, #tpu.memory_space<vmem>>, %arg6: memref<8x256xf32, #tpu.memory_space<vmem>>) attributes {dimension_semantics = [#tpu.dimension_semantics<parallel>], iteration_bounds = array<i64: 1>, scalar_prefetch = 0 : i64, scratch_operands = 0 : i64, tpu.core_type = #tpu.core_type<tc>, window_params = [{transform_indices = @transform_0, window_bounds = array<i64: 8, 16>}, {pipeline_mode = #tpu.pipeline_mode<synchronous>, transform_indices = @transform_1, window_bounds = array<i64: 16, 128>}, {pipeline_mode = #tpu.pipeline_mode<synchronous>, transform_indices = @transform_2, window_bounds = array<i64: 6, 128, 128>}, {pipeline_mode = #tpu.pipeline_mode<synchronous>, transform_indices = @transform_3, window_bounds = array<i64: 128, 256>}, {pipeline_mode = #tpu.pipeline_mode<synchronous>, transform_indices = @transform_4, window_bounds = array<i64: 8, 256>}, {transform_indices = @transform_5, window_bounds = array<i64: 8, 256>}]} {
    %c0 = arith.constant 0 : index
    %c0_0 = arith.constant 0 : index
    %0 = vector.load %arg1[%c0, %c0_0] : memref<8x16xbf16, #tpu.memory_space<vmem>>, vector<8x16xbf16>
    %c0_1 = arith.constant 0 : index
    %c0_2 = arith.constant 0 : index
    %1 = vector.load %arg2[%c0_1, %c0_2] : memref<16x128xbf16, #tpu.memory_space<vmem>>, vector<16x128xbf16>
    %cst = arith.constant dense<0.000000e+00> : vector<8x128xf32>
    %2 = tpu.matmul %0, %1, %cst {dimension_numbers = #tpu.dot_dimension_numbers<[1], [0], [0], [1], [0, 0, 1, 1], [], []>} : vector<8x16xbf16>, vector<16x128xbf16>, vector<8x128xf32> -> vector<8x128xf32>
    %c0_3 = arith.constant 0 : index
    %c0_4 = arith.constant 0 : index
    %3 = vector.load %arg5[%c0_3, %c0_4] : memref<8x256xf32, #tpu.memory_space<vmem>>, vector<1x128xf32>
    %4 = vector.broadcast %3 : vector<1x128xf32> to vector<8x128xf32>
    %5 = arith.addf %2, %4 : vector<8x128xf32>
    %6 = arith.truncf %5 : vector<8x128xf32> to vector<8x128xbf16>
    %c0_5 = arith.constant 0 : index
    %c0_6 = arith.constant 0 : index
    %c0_7 = arith.constant 0 : index
    %7 = vector.load %arg3[%c0_5, %c0_6, %c0_7] : memref<6x128x128xbf16, #tpu.memory_space<vmem>>, vector<1x128x128xbf16>
    %8 = vector.shape_cast %7 : vector<1x128x128xbf16> to vector<128x128xbf16>
    %cst_8 = arith.constant dense<0.000000e+00> : vector<8x128xf32>
    %9 = tpu.matmul %6, %8, %cst_8 {dimension_numbers = #tpu.dot_dimension_numbers<[1], [0], [0], [1], [0, 0, 1, 1], [], []>} : vector<8x128xbf16>, vector<128x128xbf16>, vector<8x128xf32> -> vector<8x128xf32>
    %c1 = arith.constant 1 : index
    %c0_9 = arith.constant 0 : index
    %10 = vector.load %arg5[%c1, %c0_9] : memref<8x256xf32, #tpu.memory_space<vmem>>, vector<1x128xf32>
    %11 = vector.broadcast %10 : vector<1x128xf32> to vector<8x128xf32>
    %12 = arith.addf %9, %11 : vector<8x128xf32>
    %cst_10 = arith.constant 0.000000e+00 : f32
    %13 = vector.broadcast %cst_10 : f32 to vector<8x128xf32>
    %14 = arith.maximumf %12, %13 : vector<8x128xf32>
    %15 = arith.truncf %14 : vector<8x128xf32> to vector<8x128xbf16>
    %c1_11 = arith.constant 1 : index
    %c0_12 = arith.constant 0 : index
    %c0_13 = arith.constant 0 : index
    %16 = vector.load %arg3[%c1_11, %c0_12, %c0_13] : memref<6x128x128xbf16, #tpu.memory_space<vmem>>, vector<1x128x128xbf16>
    %17 = vector.shape_cast %16 : vector<1x128x128xbf16> to vector<128x128xbf16>
    %cst_14 = arith.constant dense<0.000000e+00> : vector<8x128xf32>
    %18 = tpu.matmul %15, %17, %cst_14 {dimension_numbers = #tpu.dot_dimension_numbers<[1], [0], [0], [1], [0, 0, 1, 1], [], []>} : vector<8x128xbf16>, vector<128x128xbf16>, vector<8x128xf32> -> vector<8x128xf32>
    %c2 = arith.constant 2 : index
    %c0_15 = arith.constant 0 : index
    %19 = vector.load %arg5[%c2, %c0_15] : memref<8x256xf32, #tpu.memory_space<vmem>>, vector<1x128xf32>
    %20 = vector.broadcast %19 : vector<1x128xf32> to vector<8x128xf32>
    %21 = arith.addf %18, %20 : vector<8x128xf32>
    %cst_16 = arith.constant 0.000000e+00 : f32
    %22 = vector.broadcast %cst_16 : f32 to vector<8x128xf32>
    %23 = arith.maximumf %21, %22 : vector<8x128xf32>
    %24 = arith.truncf %23 : vector<8x128xf32> to vector<8x128xbf16>
    %c2_17 = arith.constant 2 : index
    %c0_18 = arith.constant 0 : index
    %c0_19 = arith.constant 0 : index
    %25 = vector.load %arg3[%c2_17, %c0_18, %c0_19] : memref<6x128x128xbf16, #tpu.memory_space<vmem>>, vector<1x128x128xbf16>
    %26 = vector.shape_cast %25 : vector<1x128x128xbf16> to vector<128x128xbf16>
    %cst_20 = arith.constant dense<0.000000e+00> : vector<8x128xf32>
    %27 = tpu.matmul %24, %26, %cst_20 {dimension_numbers = #tpu.dot_dimension_numbers<[1], [0], [0], [1], [0, 0, 1, 1], [], []>} : vector<8x128xbf16>, vector<128x128xbf16>, vector<8x128xf32> -> vector<8x128xf32>
    %c3 = arith.constant 3 : index
    %c0_21 = arith.constant 0 : index
    %28 = vector.load %arg5[%c3, %c0_21] : memref<8x256xf32, #tpu.memory_space<vmem>>, vector<1x128xf32>
    %29 = vector.broadcast %28 : vector<1x128xf32> to vector<8x128xf32>
    %30 = arith.addf %27, %29 : vector<8x128xf32>
    %cst_22 = arith.constant 0.000000e+00 : f32
    %31 = vector.broadcast %cst_22 : f32 to vector<8x128xf32>
    %32 = arith.maximumf %30, %31 : vector<8x128xf32>
    %33 = arith.truncf %32 : vector<8x128xf32> to vector<8x128xbf16>
    %c3_23 = arith.constant 3 : index
    %c0_24 = arith.constant 0 : index
    %c0_25 = arith.constant 0 : index
    %34 = vector.load %arg3[%c3_23, %c0_24, %c0_25] : memref<6x128x128xbf16, #tpu.memory_space<vmem>>, vector<1x128x128xbf16>
    %35 = vector.shape_cast %34 : vector<1x128x128xbf16> to vector<128x128xbf16>
    %cst_26 = arith.constant dense<0.000000e+00> : vector<8x128xf32>
    %36 = tpu.matmul %33, %35, %cst_26 {dimension_numbers = #tpu.dot_dimension_numbers<[1], [0], [0], [1], [0, 0, 1, 1], [], []>} : vector<8x128xbf16>, vector<128x128xbf16>, vector<8x128xf32> -> vector<8x128xf32>
    %c4 = arith.constant 4 : index
    %c0_27 = arith.constant 0 : index
    %37 = vector.load %arg5[%c4, %c0_27] : memref<8x256xf32, #tpu.memory_space<vmem>>, vector<1x128xf32>
    %38 = vector.broadcast %37 : vector<1x128xf32> to vector<8x128xf32>
    %39 = arith.addf %36, %38 : vector<8x128xf32>
    %cst_28 = arith.constant 0.000000e+00 : f32
    %40 = vector.broadcast %cst_28 : f32 to vector<8x128xf32>
    %41 = arith.maximumf %39, %40 : vector<8x128xf32>
    %42 = arith.truncf %41 : vector<8x128xf32> to vector<8x128xbf16>
    %c4_29 = arith.constant 4 : index
    %c0_30 = arith.constant 0 : index
    %c0_31 = arith.constant 0 : index
    %43 = vector.load %arg3[%c4_29, %c0_30, %c0_31] : memref<6x128x128xbf16, #tpu.memory_space<vmem>>, vector<1x128x128xbf16>
    %44 = vector.shape_cast %43 : vector<1x128x128xbf16> to vector<128x128xbf16>
    %cst_32 = arith.constant dense<0.000000e+00> : vector<8x128xf32>
    %45 = tpu.matmul %42, %44, %cst_32 {dimension_numbers = #tpu.dot_dimension_numbers<[1], [0], [0], [1], [0, 0, 1, 1], [], []>} : vector<8x128xbf16>, vector<128x128xbf16>, vector<8x128xf32> -> vector<8x128xf32>
    %c5 = arith.constant 5 : index
    %c0_33 = arith.constant 0 : index
    %46 = vector.load %arg5[%c5, %c0_33] : memref<8x256xf32, #tpu.memory_space<vmem>>, vector<1x128xf32>
    %47 = vector.broadcast %46 : vector<1x128xf32> to vector<8x128xf32>
    %48 = arith.addf %45, %47 : vector<8x128xf32>
    %cst_34 = arith.constant 0.000000e+00 : f32
    %49 = vector.broadcast %cst_34 : f32 to vector<8x128xf32>
    %50 = arith.maximumf %48, %49 : vector<8x128xf32>
    %51 = arith.truncf %50 : vector<8x128xf32> to vector<8x128xbf16>
    %c5_35 = arith.constant 5 : index
    %c0_36 = arith.constant 0 : index
    %c0_37 = arith.constant 0 : index
    %52 = vector.load %arg3[%c5_35, %c0_36, %c0_37] : memref<6x128x128xbf16, #tpu.memory_space<vmem>>, vector<1x128x128xbf16>
    %53 = vector.shape_cast %52 : vector<1x128x128xbf16> to vector<128x128xbf16>
    %cst_38 = arith.constant dense<0.000000e+00> : vector<8x128xf32>
    %54 = tpu.matmul %51, %53, %cst_38 {dimension_numbers = #tpu.dot_dimension_numbers<[1], [0], [0], [1], [0, 0, 1, 1], [], []>} : vector<8x128xbf16>, vector<128x128xbf16>, vector<8x128xf32> -> vector<8x128xf32>
    %c6 = arith.constant 6 : index
    %c0_39 = arith.constant 0 : index
    %55 = vector.load %arg5[%c6, %c0_39] : memref<8x256xf32, #tpu.memory_space<vmem>>, vector<1x128xf32>
    %56 = vector.broadcast %55 : vector<1x128xf32> to vector<8x128xf32>
    %57 = arith.addf %54, %56 : vector<8x128xf32>
    %cst_40 = arith.constant 0.000000e+00 : f32
    %58 = vector.broadcast %cst_40 : f32 to vector<8x128xf32>
    %59 = arith.maximumf %57, %58 : vector<8x128xf32>
    %60 = arith.truncf %59 : vector<8x128xf32> to vector<8x128xbf16>
    %c0_41 = arith.constant 0 : index
    %c0_42 = arith.constant 0 : index
    %61 = vector.load %arg4[%c0_41, %c0_42] : memref<128x256xbf16, #tpu.memory_space<vmem>>, vector<128x256xbf16>
    %cst_43 = arith.constant dense<0.000000e+00> : vector<8x256xf32>
    %62 = tpu.matmul %60, %61, %cst_43 {dimension_numbers = #tpu.dot_dimension_numbers<[1], [0], [0], [1], [0, 0, 1, 1], [], []>} : vector<8x128xbf16>, vector<128x256xbf16>, vector<8x256xf32> -> vector<8x256xf32>
    %c7 = arith.constant 7 : index
    %c0_44 = arith.constant 0 : index
    %63 = vector.load %arg5[%c7, %c0_44] : memref<8x256xf32, #tpu.memory_space<vmem>>, vector<1x256xf32>
    %64 = vector.broadcast %63 : vector<1x256xf32> to vector<8x256xf32>
    %65 = arith.addf %62, %64 : vector<8x256xf32>
    %66 = vector.extract_strided_slice %65 {offsets = [0, 0], sizes = [8, 128], strides = [1, 1]} : vector<8x256xf32> to vector<8x128xf32>
    %c0_45 = arith.constant 0 : index
    %c0_46 = arith.constant 0 : index
    %67 = vector.load %arg6[%c0_45, %c0_46] : memref<8x256xf32, #tpu.memory_space<vmem>>, vector<8x128xf32>
    tpu.vector_store %arg6[%c0_45, %c0_46], %66 {strides = array<i32>} : memref<8x256xf32, #tpu.memory_space<vmem>>, vector<8x128xf32>,
    %68 = vector.extract_strided_slice %65 {offsets = [0, 128], sizes = [8, 128], strides = [1, 1]} : vector<8x256xf32> to vector<8x128xf32>
    %cst_47 = arith.constant -2.000000e+01 : f32
    %cst_48 = arith.constant 2.000000e+00 : f32
    %69 = vector.broadcast %cst_47 : f32 to vector<8x128xf32>
    %70 = arith.maximumf %69, %68 : vector<8x128xf32>
    %71 = vector.broadcast %cst_48 : f32 to vector<8x128xf32>
    %72 = arith.minimumf %71, %70 : vector<8x128xf32>
    %c0_49 = arith.constant 0 : index
    %c128 = arith.constant 128 : index
    %73 = vector.load %arg6[%c0_49, %c128] : memref<8x256xf32, #tpu.memory_space<vmem>>, vector<8x128xf32>
    tpu.vector_store %arg6[%c0_49, %c128], %72 {strides = array<i32>} : memref<8x256xf32, #tpu.memory_space<vmem>>, vector<8x128xf32>,
    return
  }
  func.func @transform_0(%arg0: i32) -> (i32, i32) {
    %c0_i32 = arith.constant 0 : i32
    %c0_i32_0 = arith.constant 0 : i32
    return %arg0, %c0_i32 : i32, i32
  }
  func.func @transform_1(%arg0: i32) -> (i32, i32) {
    %c0_i32 = arith.constant 0 : i32
    %c0_i32_0 = arith.constant 0 : i32
    %c0_i32_1 = arith.constant 0 : i32
    return %c0_i32, %c0_i32_0 : i32, i32
  }
  func.func @transform_2(%arg0: i32) -> (i32, i32, i32) {
    %c0_i32 = arith.constant 0 : i32
    %c0_i32_0 = arith.constant 0 : i32
    %c0_i32_1 = arith.constant 0 : i32
    %c0_i32_2 = arith.constant 0 : i32
    return %c0_i32, %c0_i32_0, %c0_i32_1 : i32, i32, i32
  }
  func.func @transform_3(%arg0: i32) -> (i32, i32) {
    %c0_i32 = arith.constant 0 : i32
    %c0_i32_0 = arith.constant 0 : i32
    %c0_i32_1 = arith.constant 0 : i32
    return %c0_i32, %c0_i32_0 : i32, i32
  }
  func.func @transform_4(%arg0: i32) -> (i32, i32) {
    %c0_i32 = arith.constant 0 : i32
    %c0_i32_0 = arith.constant 0 : i32
    %c0_i32_1 = arith.constant 0 : i32
    return %c0_i32, %c0_i32_0 : i32, i32
  }
  func.func @transform_5(%arg0: i32) -> (i32, i32) {
    %c0_i32 = arith.constant 0 : i32
    %c0_i32_0 = arith.constant 0 : i32
    return %arg0, %c0_i32 : i32, i32
  }
}

</mosaic_0001>

<llo_original>
// kernel: tpu_custom_call.1
$region0: #{tpu_custom_call.1}
  #allocation0 [shape = 'u32[]', space=smem, size = 0x4, offset = 0x4, fixed_abs, tag = 'smem constant byte address 0x4 - core index']
  #allocation1 [shape = 'u32[144,128]{1,0:T(1,128)}', space=vmem, size = 0x12000, scoped, tag = 'internal scratch']
  %s0 = inlined_call_operand.hbm [shape: bf16[8,16], index: 0, kind: input, shape index: {}]
  %s1 = inlined_call_operand.hbm [shape: bf16[16,128], index: 1, kind: input, shape index: {}]
  %s2 = inlined_call_operand.hbm [shape: bf16[6,128,128], index: 2, kind: input, shape index: {}]
  %s3 = inlined_call_operand.hbm [shape: bf16[128,256], index: 3, kind: input, shape index: {}]
  %s4 = inlined_call_operand.hbm [shape: f32[8,256], index: 4, kind: input, shape index: {}]
  %s5 = inlined_call_operand.hbm [shape: f32[8,256], index: 5, kind: output, shape index: {}]
  %s6 = sld [smem:[#allocation0]]
  $region50: #{tpu_custom_call.1} parent=0
    _
  %s8 = ssub.s32 1, %s6
  %s9 = scalar_select 0, %s8, %s6
  $region1: #{tpu_custom_call.1} parent=0
    #allocation2 [shape = 'u8[2048]{0}', space=vmem, size = 0x800, scoped, tag = 'input window, operand 0, single buffered']
    #allocation3 [shape = 's32[1]{0}', space=sflag, size = 0x4, scoped, tag = 'scoped memory for tpu_custom_call.1']
    #allocation4 [shape = 's32[1]{0}', space=sflag, size = 0x4, scoped, tag = 'scoped memory for tpu_custom_call.1']
    #allocation5 [shape = 'u8[4096]{0}', space=vmem, size = 0x1000, scoped, tag = 'input window, operand 1, single buffered']
    #allocation6 [shape = 's32[1]{0}', space=sflag, size = 0x4, scoped, tag = 'scoped memory for tpu_custom_call.1']
    #allocation7 [shape = 'u8[196608]{0}', space=vmem, size = 0x30000, scoped, tag = 'input window, operand 2, single buffered']
    #allocation8 [shape = 'u8[65536]{0}', space=vmem, size = 0x10000, scoped, tag = 'input window, operand 3, single buffered']
    #allocation9 [shape = 's32[1]{0}', space=sflag, size = 0x4, scoped, tag = 'scoped memory for tpu_custom_call.1']
    #allocation10 [shape = 'u8[8192]{0}', space=vmem, size = 0x2000, scoped, tag = 'input window, operand 4, single buffered']
    #allocation11 [shape = 'u8[8192]{0}', space=vmem, size = 0x2000, scoped, tag = 'output window, operand 0, single buffered']
    %10 = vsyncpa [#allocation3], 0
    %11 = vsyncpa [#allocation6], 0
    %12 = vsyncpa [#allocation9], 0
    %13 = vsyncpa [#allocation4], 0
    // Predicated region
    $region2: #{tpu_custom_call.1} parent=1 // pred_check
      _
    $region3: #{tpu_custom_call.1} parent=1 // pred_check_branch
      %15 = sbr.rel (0) target = $region5
    $region4: #{tpu_custom_call.1} parent=1 // pred_region
      %s17 = ssub.s32 64, 64
      %18 = vsyncadd [#allocation3], %s17
      %s20 = sshll.u32 [#allocation2], 4
      %s21 = int_to_ptr.vmem [resolvable:$true] %s20
      %23 = dma.hbm_to_vmem [thread:$0]  %s0, 64, %s21, [#allocation3]
    $region5: #{tpu_custom_call.1} parent=1 // pred_fallthru
      _
    // Predicated region
    $region6: #{tpu_custom_call.1} parent=1 // pred_check
      _
    $region7: #{tpu_custom_call.1} parent=1 // pred_check_branch
      %25 = sbr.rel (0) target = $region9
    $region8: #{tpu_custom_call.1} parent=1 // pred_region
      %s27 = ssub.s32 128, 128
      %28 = vsyncadd [#allocation6], %s27
      %s29 = sshll.u32 [#allocation5], 4
      %s30 = int_to_ptr.vmem [resolvable:$true] %s29
      %35 = dma.hbm_to_vmem [thread:$0]  %s1, 128, %s30, [#allocation6], 64, 64, 4
    $region9: #{tpu_custom_call.1} parent=1 // pred_fallthru
      _
    // Predicated region
    $region10: #{tpu_custom_call.1} parent=1 // pred_check
      _
    $region11: #{tpu_custom_call.1} parent=1 // pred_check_branch
      %37 = sbr.rel (0) target = $region13
    $region12: #{tpu_custom_call.1} parent=1 // pred_region
      %s39 = ssub.s32 6144, 6144
      %40 = vsyncadd [#allocation6], %s39
      %s41 = sshll.u32 [#allocation7], 4
      %s42 = int_to_ptr.vmem [resolvable:$true] %s41
      %47 = dma.hbm_to_vmem [thread:$0]  %s2, 6144, %s42, [#allocation6], 64, 64, 4
    $region13: #{tpu_custom_call.1} parent=1 // pred_fallthru
      _
    // Predicated region
    $region14: #{tpu_custom_call.1} parent=1 // pred_check
      _
    $region15: #{tpu_custom_call.1} parent=1 // pred_check_branch
      %49 = sbr.rel (0) target = $region17
    $region16: #{tpu_custom_call.1} parent=1 // pred_region
      %s51 = ssub.s32 2048, 2048
      %52 = vsyncadd [#allocation9], %s51
      %s53 = sshll.u32 [#allocation8], 4
      %s54 = int_to_ptr.vmem [resolvable:$true] %s53
      %59 = dma.hbm_to_vmem [thread:$0]  %s3, 2048, %s54, [#allocation9], 128, 128, 8
    $region17: #{tpu_custom_call.1} parent=1 // pred_fallthru
      _
    // Predicated region
    $region18: #{tpu_custom_call.1} parent=1 // pred_check
      _
    $region19: #{tpu_custom_call.1} parent=1 // pred_check_branch
      %61 = sbr.rel (0) target = $region21
    $region20: #{tpu_custom_call.1} parent=1 // pred_region
      %s63 = ssub.s32 256, 256
      %64 = vsyncadd [#allocation9], %s63
      %s66 = sshll.u32 [#allocation10], 4
      %s67 = int_to_ptr.vmem [resolvable:$true] %s66
      %69 = dma.hbm_to_vmem [thread:$0]  %s4, 256, %s67, [#allocation9]
    $region21: #{tpu_custom_call.1} parent=1 // pred_fallthru
      _
    // Predicated region
    $region22: #{tpu_custom_call.1} parent=1 // pred_check
      _
    $region23: #{tpu_custom_call.1} parent=1 // pred_check_branch
      %71 = sbr.rel (0) target = $region25
    $region24: #{tpu_custom_call.1} parent=1 // pred_region
      %72 = dma.done [#allocation3], 64
    $region25: #{tpu_custom_call.1} parent=1 // pred_fallthru
      _
    // Predicated region
    $region26: #{tpu_custom_call.1} parent=1 // pred_check
      _
    $region27: #{tpu_custom_call.1} parent=1 // pred_check_branch
      %74 = sbr.rel (0) target = $region29
    $region28: #{tpu_custom_call.1} parent=1 // pred_region
      %75 = dma.done [#allocation6], 128
    $region29: #{tpu_custom_call.1} parent=1 // pred_fallthru
      _
    // Predicated region
    $region30: #{tpu_custom_call.1} parent=1 // pred_check
      _
    $region31: #{tpu_custom_call.1} parent=1 // pred_check_branch
      %77 = sbr.rel (0) target = $region33
    $region32: #{tpu_custom_call.1} parent=1 // pred_region
      %78 = dma.done [#allocation6], 6144
    $region33: #{tpu_custom_call.1} parent=1 // pred_fallthru
      _
    // Predicated region
    $region34: #{tpu_custom_call.1} parent=1 // pred_check
      _
    $region35: #{tpu_custom_call.1} parent=1 // pred_check_branch
      %80 = sbr.rel (0) target = $region37
    $region36: #{tpu_custom_call.1} parent=1 // pred_region
      %81 = dma.done [#allocation9], 2048
    $region37: #{tpu_custom_call.1} parent=1 // pred_fallthru
      _
    // Predicated region
    $region38: #{tpu_custom_call.1} parent=1 // pred_check
      _
    $region39: #{tpu_custom_call.1} parent=1 // pred_check_branch
      %83 = sbr.rel (0) target = $region41
    $region40: #{tpu_custom_call.1} parent=1 // pred_region
      %84 = dma.done [#allocation9], 256
    $region41: #{tpu_custom_call.1} parent=1 // pred_fallthru
      _
    %v86 = vld [vmem:[#allocation2] sm:$0xf]
    %v87 = vld [vmem:[#allocation5] sm:$0xf]
    %v88 = vld [vmem:[#allocation5 + $0x4] sm:$0xf]
    %v89 = vld [vmem:[#allocation10] ss:$0 sm:$0xff]
    %v92 = vunpack.c.l.b16 %v87
    %v93 = vunpack.c.l.b16 %v88
    %v94 = vpack.c.b16 %v93, %v92
    %vm96 = vcmask 130048
    %v98 = vsel %vm96, %v86, 0
    %100 = vmatprep.subr.bf16.mxu0 0
    %101 = vmatpush1.bf16.msra.mxu0 %v94
    %102 = vmatprep.subr.bf16.mxu0 0
    %103 = vmatpush1.bf16.msra.mxu0 0
    %104 = vmatprep.subr.bf16.mxu0 0
    %105 = vmatpush1.bf16.msra.mxu0 0
    %106 = vmatprep.subr.bf16.mxu0 0
    %107 = vmatpush1.bf16.msra.mxu0 0
    %108 = vmatprep.subr.bf16.mxu0 0
    %109 = vmatpush1.bf16.msra.mxu0 0
    %110 = vmatprep.subr.bf16.mxu0 0
    %111 = vmatpush1.bf16.msra.mxu0 0
    %112 = vmatprep.subr.bf16.mxu0 0
    %113 = vmatpush1.bf16.msra.mxu0 0
    %114 = vmatprep.subr.bf16.mxu0 0
    %115 = vmatpush1.bf16.msra.mxu0 0
    %116 = vmatprep.subr.bf16.mxu0 0
    %117 = vmatpush1.bf16.msra.mxu0 0
    %118 = vmatprep.subr.bf16.mxu0 0
    %119 = vmatpush1.bf16.msra.mxu0 0
    %120 = vmatprep.subr.bf16.mxu0 0
    %121 = vmatpush1.bf16.msra.mxu0 0
    %122 = vmatprep.subr.bf16.mxu0 0
    %123 = vmatpush1.bf16.msra.mxu0 0
    %124 = vmatprep.subr.bf16.mxu0 0
    %125 = vmatpush1.bf16.msra.mxu0 0
    %126 = vmatprep.subr.bf16.mxu0 0
    %127 = vmatpush1.bf16.msra.mxu0 0
    %128 = vmatprep.subr.bf16.mxu0 0
    %129 = vmatpush1.bf16.msra.mxu0 0
    %130 = vmatprep.subr.bf16.mxu0 0
    %131 = vmatpush1.bf16.msra.mxu0 0
    %132 = vmatprep.mubr.bf16.mxu0 0
    %133 = vmatmul.mubr.bf16.gmra.mrb[0].mxu0 %v98
    %v134 = vpop.f32.mrb[0].mxu0
    %v135 = vadd.f32 %v89, %v134
    %v136 = vpop.f32.mrb[0].mxu0
    %v137 = vpop.f32.mrb[0].mxu0
    %v138 = vpop.f32.mrb[0].mxu0
    %139 = vdwg.mxu0
    %v140 = vpack.c.bf16 %v135, %v135
    %v141 = vld [vmem:[#allocation7] sm:$0xf]
    %v142 = vld [vmem:[#allocation7 + $0x4] sm:$0xf]
    %v143 = vld [vmem:[#allocation7 + $0x8] sm:$0xf]
    %v144 = vld [vmem:[#allocation7 + $0xc] sm:$0xf]
    %v145 = vld [vmem:[#allocation7 + $0x10] sm:$0xf]
    %v146 = vld [vmem:[#allocation7 + $0x14] sm:$0xf]
    %v147 = vld [vmem:[#allocation7 + $0x18] sm:$0xf]
    %v148 = vld [vmem:[#allocation7 + $0x1c] sm:$0xf]
    %v149 = vld [vmem:[#allocation7 + $0x20] sm:$0xf]
    %v150 = vld [vmem:[#allocation7 + $0x24] sm:$0xf]
    %v151 = vld [vmem:[#allocation7 + $0x28] sm:$0xf]
    %v152 = vld [vmem:[#allocation7 + $0x2c] sm:$0xf]
    %v153 = vld [vmem:[#allocation7 + $0x30] sm:$0xf]
    %v154 = vld [vmem:[#allocation7 + $0x34] sm:$0xf]
    %v155 = vld [vmem:[#allocation7 + $0x38] sm:$0xf]
    %v156 = vld [vmem:[#allocation7 + $0x3c] sm:$0xf]
    %v157 = vld [vmem:[#allocation10 + $0x1] ss:$0 sm:$0xff]
    %v174 = vunpack.c.l.b16 %v141
    %v175 = vunpack.c.l.b16 %v142
    %v176 = vunpack.c.l.b16 %v143
    %v177 = vunpack.c.l.b16 %v144
    %v178 = vunpack.c.l.b16 %v145
    %v179 = vunpack.c.l.b16 %v146
    %v180 = vunpack.c.l.b16 %v147
    %v181 = vunpack.c.l.b16 %v148
    %v182 = vunpack.c.l.b16 %v149
    %v183 = vunpack.c.l.b16 %v150
    %v184 = vunpack.c.l.b16 %v151
    %v185 = vunpack.c.l.b16 %v152
    %v186 = vunpack.c.l.b16 %v153
    %v187 = vunpack.c.l.b16 %v154
    %v188 = vunpack.c.l.b16 %v155
    %v189 = vunpack.c.l.b16 %v156
    %v190 = vpack.c.b16 %v175, %v174
    %v191 = vpack.c.b16 %v177, %v176
    %v192 = vpack.c.b16 %v179, %v178
    %v193 = vpack.c.b16 %v181, %v180
    %v194 = vpack.c.b16 %v183, %v182
    %v195 = vpack.c.b16 %v185, %v184
    %v196 = vpack.c.b16 %v187, %v186
    %v197 = vpack.c.b16 %v189, %v188
    %206 = vmatprep.subr.bf16.mxu0 0
    %207 = vmatpush1.bf16.msra.mxu0 %v190
    %208 = vmatprep.subr.bf16.mxu0 0
    %209 = vmatpush1.bf16.msra.mxu0 %v191
    %210 = vmatprep.subr.bf16.mxu0 0
    %211 = vmatpush1.bf16.msra.mxu0 %v192
    %212 = vmatprep.subr.bf16.mxu0 0
    %213 = vmatpush1.bf16.msra.mxu0 %v193
    %214 = vmatprep.subr.bf16.mxu0 0
    %215 = vmatpush1.bf16.msra.mxu0 %v194
    %216 = vmatprep.subr.bf16.mxu0 0
    %217 = vmatpush1.bf16.msra.mxu0 %v195
    %218 = vmatprep.subr.bf16.mxu0 0
    %219 = vmatpush1.bf16.msra.mxu0 %v196
    %220 = vmatprep.subr.bf16.mxu0 0
    %221 = vmatpush1.bf16.msra.mxu0 %v197
    %222 = vmatprep.subr.bf16.mxu0 0
    %223 = vmatpush1.bf16.msra.mxu0 0
    %224 = vmatprep.subr.bf16.mxu0 0
    %225 = vmatpush1.bf16.msra.mxu0 0
    %226 = vmatprep.subr.bf16.mxu0 0
    %227 = vmatpush1.bf16.msra.mxu0 0
    %228 = vmatprep.subr.bf16.mxu0 0
    %229 = vmatpush1.bf16.msra.mxu0 0
    %230 = vmatprep.subr.bf16.mxu0 0
    %231 = vmatpush1.bf16.msra.mxu0 0
    %232 = vmatprep.subr.bf16.mxu0 0
    %233 = vmatpush1.bf16.msra.mxu0 0
    %234 = vmatprep.subr.bf16.mxu0 0
    %235 = vmatpush1.bf16.msra.mxu0 0
    %236 = vmatprep.subr.bf16.mxu0 0
    %237 = vmatpush1.bf16.msra.mxu0 0
    %238 = vmatprep.mubr.bf16.mxu0 0
    %239 = vmatmul.mubr.bf16.gmra.mrb[0].mxu0 %v140
    %v240 = vpop.f32.mrb[0].mxu0
    %v241 = vadd.f32 %v157, %v240
    %v242 = vpop.f32.mrb[0].mxu0
    %v243 = vpop.f32.mrb[0].mxu0
    %v244 = vpop.f32.mrb[0].mxu0
    %245 = vdwg.mxu0
    %v246 = vmax.f32 %v241, 0.0
    %v247 = vpack.c.bf16 %v246, %v246
    %s248 = scalar_lea.vmem [#allocation7], 64
    %v249 = vld [vmem:[%s248] sm:$0xf]
    %v250 = vld [vmem:[%s248 + $0x4] sm:$0xf]
    %v251 = vld [vmem:[%s248 + $0x8] sm:$0xf]
    %v252 = vld [vmem:[%s248 + $0xc] sm:$0xf]
    %v253 = vld [vmem:[%s248 + $0x10] sm:$0xf]
    %v254 = vld [vmem:[%s248 + $0x14] sm:$0xf]
    %v255 = vld [vmem:[%s248 + $0x18] sm:$0xf]
    %v256 = vld [vmem:[%s248 + $0x1c] sm:$0xf]
    %v257 = vld [vmem:[%s248 + $0x20] sm:$0xf]
    %v258 = vld [vmem:[%s248 + $0x24] sm:$0xf]
    %v259 = vld [vmem:[%s248 + $0x28] sm:$0xf]
    %v260 = vld [vmem:[%s248 + $0x2c] sm:$0xf]
    %v261 = vld [vmem:[%s248 + $0x30] sm:$0xf]
    %v262 = vld [vmem:[%s248 + $0x34] sm:$0xf]
    %v263 = vld [vmem:[%s248 + $0x38] sm:$0xf]
    %v264 = vld [vmem:[%s248 + $0x3c] sm:$0xf]
    %v265 = vld [vmem:[#allocation10 + $0x2] ss:$0 sm:$0xff]
    %v282 = vunpack.c.l.b16 %v249
    %v283 = vunpack.c.l.b16 %v250
    %v284 = vunpack.c.l.b16 %v251
    %v285 = vunpack.c.l.b16 %v252
    %v286 = vunpack.c.l.b16 %v253
    %v287 = vunpack.c.l.b16 %v254
    %v288 = vunpack.c.l.b16 %v255
    %v289 = vunpack.c.l.b16 %v256
    %v290 = vunpack.c.l.b16 %v257
    %v291 = vunpack.c.l.b16 %v258
    %v292 = vunpack.c.l.b16 %v259
    %v293 = vunpack.c.l.b16 %v260
    %v294 = vunpack.c.l.b16 %v261
    %v295 = vunpack.c.l.b16 %v262
    %v296 = vunpack.c.l.b16 %v263
    %v297 = vunpack.c.l.b16 %v264
    %v298 = vpack.c.b16 %v283, %v282
    %v299 = vpack.c.b16 %v285, %v284
    %v300 = vpack.c.b16 %v287, %v286
    %v301 = vpack.c.b16 %v289, %v288
    %v302 = vpack.c.b16 %v291, %v290
    %v303 = vpack.c.b16 %v293, %v292
    %v304 = vpack.c.b16 %v295, %v294
    %v305 = vpack.c.b16 %v297, %v296
    %314 = vmatprep.subr.bf16.mxu0 0
    %315 = vmatpush1.bf16.msra.mxu0 %v298
    %316 = vmatprep.subr.bf16.mxu0 0
    %317 = vmatpush1.bf16.msra.mxu0 %v299
    %318 = vmatprep.subr.bf16.mxu0 0
    %319 = vmatpush1.bf16.msra.mxu0 %v300
    %320 = vmatprep.subr.bf16.mxu0 0
    %321 = vmatpush1.bf16.msra.mxu0 %v301
    %322 = vmatprep.subr.bf16.mxu0 0
    %323 = vmatpush1.bf16.msra.mxu0 %v302
    %324 = vmatprep.subr.bf16.mxu0 0
    %325 = vmatpush1.bf16.msra.mxu0 %v303
    %326 = vmatprep.subr.bf16.mxu0 0
    %327 = vmatpush1.bf16.msra.mxu0 %v304
    %328 = vmatprep.subr.bf16.mxu0 0
    %329 = vmatpush1.bf16.msra.mxu0 %v305
    %330 = vmatprep.subr.bf16.mxu0 0
    %331 = vmatpush1.bf16.msra.mxu0 0
    %332 = vmatprep.subr.bf16.mxu0 0
    %333 = vmatpush1.bf16.msra.mxu0 0
    %334 = vmatprep.subr.bf16.mxu0 0
    %335 = vmatpush1.bf16.msra.mxu0 0
    %336 = vmatprep.subr.bf16.mxu0 0
    %337 = vmatpush1.bf16.msra.mxu0 0
    %338 = vmatprep.subr.bf16.mxu0 0
    %339 = vmatpush1.bf16.msra.mxu0 0
    %340 = vmatprep.subr.bf16.mxu0 0
    %341 = vmatpush1.bf16.msra.mxu0 0
    %342 = vmatprep.subr.bf16.mxu0 0
    %343 = vmatpush1.bf16.msra.mxu0 0
    %344 = vmatprep.subr.bf16.mxu0 0
    %345 = vmatpush1.bf16.msra.mxu0 0
    %346 = vmatprep.mubr.bf16.mxu0 0
    %347 = vmatmul.mubr.bf16.gmra.mrb[0].mxu0 %v247
    %v348 = vpop.f32.mrb[0].mxu0
    %v349 = vadd.f32 %v265, %v348
    %v350 = vpop.f32.mrb[0].mxu0
    %v351 = vpop.f32.mrb[0].mxu0
    %v352 = vpop.f32.mrb[0].mxu0
    %353 = vdwg.mxu0
    %v354 = vmax.f32 %v349, 0.0
    %v355 = vpack.c.bf16 %v354, %v354
    %s356 = scalar_lea.vmem [#allocation7], 128
    %v357 = vld [vmem:[%s356] sm:$0xf]
    %v358 = vld [vmem:[%s356 + $0x4] sm:$0xf]
    %v359 = vld [vmem:[%s356 + $0x8] sm:$0xf]
    %v360 = vld [vmem:[%s356 + $0xc] sm:$0xf]
    %v361 = vld [vmem:[%s356 + $0x10] sm:$0xf]
    %v362 = vld [vmem:[%s356 + $0x14] sm:$0xf]
    %v363 = vld [vmem:[%s356 + $0x18] sm:$0xf]
    %v364 = vld [vmem:[%s356 + $0x1c] sm:$0xf]
    %v365 = vld [vmem:[%s356 + $0x20] sm:$0xf]
    %v366 = vld [vmem:[%s356 + $0x24] sm:$0xf]
    %v367 = vld [vmem:[%s356 + $0x28] sm:$0xf]
    %v368 = vld [vmem:[%s356 + $0x2c] sm:$0xf]
    %v369 = vld [vmem:[%s356 + $0x30] sm:$0xf]
    %v370 = vld [vmem:[%s356 + $0x34] sm:$0xf]
    %v371 = vld [vmem:[%s356 + $0x38] sm:$0xf]
    %v372 = vld [vmem:[%s356 + $0x3c] sm:$0xf]
    %v373 = vld [vmem:[#allocation10 + $0x3] ss:$0 sm:$0xff]
    %v390 = vunpack.c.l.b16 %v357
    %v391 = vunpack.c.l.b16 %v358
    %v392 = vunpack.c.l.b16 %v359
    %v393 = vunpack.c.l.b16 %v360
    %v394 = vunpack.c.l.b16 %v361
    %v395 = vunpack.c.l.b16 %v362
    %v396 = vunpack.c.l.b16 %v363
    %v397 = vunpack.c.l.b16 %v364
    %v398 = vunpack.c.l.b16 %v365
    %v399 = vunpack.c.l.b16 %v366
    %v400 = vunpack.c.l.b16 %v367
    %v401 = vunpack.c.l.b16 %v368
    %v402 = vunpack.c.l.b16 %v369
    %v403 = vunpack.c.l.b16 %v370
    %v404 = vunpack.c.l.b16 %v371
    %v405 = vunpack.c.l.b16 %v372
    %v406 = vpack.c.b16 %v391, %v390
    %v407 = vpack.c.b16 %v393, %v392
    %v408 = vpack.c.b16 %v395, %v394
    %v409 = vpack.c.b16 %v397, %v396
    %v410 = vpack.c.b16 %v399, %v398
    %v411 = vpack.c.b16 %v401, %v400
    %v412 = vpack.c.b16 %v403, %v402
    %v413 = vpack.c.b16 %v405, %v404
    %422 = vmatprep.subr.bf16.mxu0 0
    %423 = vmatpush1.bf16.msra.mxu0 %v406
    %424 = vmatprep.subr.bf16.mxu0 0
    %425 = vmatpush1.bf16.msra.mxu0 %v407
    %426 = vmatprep.subr.bf16.mxu0 0
    %427 = vmatpush1.bf16.msra.mxu0 %v408
    %428 = vmatprep.subr.bf16.mxu0 0
    %429 = vmatpush1.bf16.msra.mxu0 %v409
    %430 = vmatprep.subr.bf16.mxu0 0
    %431 = vmatpush1.bf16.msra.mxu0 %v410
    %432 = vmatprep.subr.bf16.mxu0 0
    %433 = vmatpush1.bf16.msra.mxu0 %v411
    %434 = vmatprep.subr.bf16.mxu0 0
    %435 = vmatpush1.bf16.msra.mxu0 %v412
    %436 = vmatprep.subr.bf16.mxu0 0
    %437 = vmatpush1.bf16.msra.mxu0 %v413
    %438 = vmatprep.subr.bf16.mxu0 0
    %439 = vmatpush1.bf16.msra.mxu0 0
    %440 = vmatprep.subr.bf16.mxu0 0
    %441 = vmatpush1.bf16.msra.mxu0 0
    %442 = vmatprep.subr.bf16.mxu0 0
    %443 = vmatpush1.bf16.msra.mxu0 0
    %444 = vmatprep.subr.bf16.mxu0 0
    %445 = vmatpush1.bf16.msra.mxu0 0
    %446 = vmatprep.subr.bf16.mxu0 0
    %447 = vmatpush1.bf16.msra.mxu0 0
    %448 = vmatprep.subr.bf16.mxu0 0
    %449 = vmatpush1.bf16.msra.mxu0 0
    %450 = vmatprep.subr.bf16.mxu0 0
    %451 = vmatpush1.bf16.msra.mxu0 0
    %452 = vmatprep.subr.bf16.mxu0 0
    %453 = vmatpush1.bf16.msra.mxu0 0
    %454 = vmatprep.mubr.bf16.mxu0 0
    %455 = vmatmul.mubr.bf16.gmra.mrb[0].mxu0 %v355
    %v456 = vpop.f32.mrb[0].mxu0
    %v457 = vadd.f32 %v373, %v456
    %v458 = vpop.f32.mrb[0].mxu0
    %v459 = vpop.f32.mrb[0].mxu0
    %v460 = vpop.f32.mrb[0].mxu0
    %461 = vdwg.mxu0
    %v462 = vmax.f32 %v457, 0.0
    %v463 = vpack.c.bf16 %v462, %v462
    %s464 = scalar_lea.vmem [#allocation7], 192
    %v465 = vld [vmem:[%s464] sm:$0xf]
    %v466 = vld [vmem:[%s464 + $0x4] sm:$0xf]
    %v467 = vld [vmem:[%s464 + $0x8] sm:$0xf]
    %v468 = vld [vmem:[%s464 + $0xc] sm:$0xf]
    %v469 = vld [vmem:[%s464 + $0x10] sm:$0xf]
    %v470 = vld [vmem:[%s464 + $0x14] sm:$0xf]
    %v471 = vld [vmem:[%s464 + $0x18] sm:$0xf]
    %v472 = vld [vmem:[%s464 + $0x1c] sm:$0xf]
    %v473 = vld [vmem:[%s464 + $0x20] sm:$0xf]
    %v474 = vld [vmem:[%s464 + $0x24] sm:$0xf]
    %v475 = vld [vmem:[%s464 + $0x28] sm:$0xf]
    %v476 = vld [vmem:[%s464 + $0x2c] sm:$0xf]
    %v477 = vld [vmem:[%s464 + $0x30] sm:$0xf]
    %v478 = vld [vmem:[%s464 + $0x34] sm:$0xf]
    %v479 = vld [vmem:[%s464 + $0x38] sm:$0xf]
    %v480 = vld [vmem:[%s464 + $0x3c] sm:$0xf]
    %v481 = vld [vmem:[#allocation10 + $0x4] ss:$0 sm:$0xff]
    %v498 = vunpack.c.l.b16 %v465
    %v499 = vunpack.c.l.b16 %v466
    %v500 = vunpack.c.l.b16 %v467
    %v501 = vunpack.c.l.b16 %v468
    %v502 = vunpack.c.l.b16 %v469
    %v503 = vunpack.c.l.b16 %v470
    %v504 = vunpack.c.l.b16 %v471
    %v505 = vunpack.c.l.b16 %v472
    %v506 = vunpack.c.l.b16 %v473
    %v507 = vunpack.c.l.b16 %v474
    %v508 = vunpack.c.l.b16 %v475
    %v509 = vunpack.c.l.b16 %v476
    %v510 = vunpack.c.l.b16 %v477
    %v511 = vunpack.c.l.b16 %v478
    %v512 = vunpack.c.l.b16 %v479
    %v513 = vunpack.c.l.b16 %v480
    %v514 = vpack.c.b16 %v499, %v498
    %v515 = vpack.c.b16 %v501, %v500
    %v516 = vpack.c.b16 %v503, %v502
    %v517 = vpack.c.b16 %v505, %v504
    %v518 = vpack.c.b16 %v507, %v506
    %v519 = vpack.c.b16 %v509, %v508
    %v520 = vpack.c.b16 %v511, %v510
    %v521 = vpack.c.b16 %v513, %v512
    %530 = vmatprep.subr.bf16.mxu0 0
    %531 = vmatpush1.bf16.msra.mxu0 %v514
    %532 = vmatprep.subr.bf16.mxu0 0
    %533 = vmatpush1.bf16.msra.mxu0 %v515
    %534 = vmatprep.subr.bf16.mxu0 0
    %535 = vmatpush1.bf16.msra.mxu0 %v516
    %536 = vmatprep.subr.bf16.mxu0 0
    %537 = vmatpush1.bf16.msra.mxu0 %v517
    %538 = vmatprep.subr.bf16.mxu0 0
    %539 = vmatpush1.bf16.msra.mxu0 %v518
    %540 = vmatprep.subr.bf16.mxu0 0
    %541 = vmatpush1.bf16.msra.mxu0 %v519
    %542 = vmatprep.subr.bf16.mxu0 0
    %543 = vmatpush1.bf16.msra.mxu0 %v520
    %544 = vmatprep.subr.bf16.mxu0 0
    %545 = vmatpush1.bf16.msra.mxu0 %v521
    %546 = vmatprep.subr.bf16.mxu0 0
    %547 = vmatpush1.bf16.msra.mxu0 0
    %548 = vmatprep.subr.bf16.mxu0 0
    %549 = vmatpush1.bf16.msra.mxu0 0
    %550 = vmatprep.subr.bf16.mxu0 0
    %551 = vmatpush1.bf16.msra.mxu0 0
    %552 = vmatprep.subr.bf16.mxu0 0
    %553 = vmatpush1.bf16.msra.mxu0 0
    %554 = vmatprep.subr.bf16.mxu0 0
    %555 = vmatpush1.bf16.msra.mxu0 0
    %556 = vmatprep.subr.bf16.mxu0 0
    %557 = vmatpush1.bf16.msra.mxu0 0
    %558 = vmatprep.subr.bf16.mxu0 0
    %559 = vmatpush1.bf16.msra.mxu0 0
    %560 = vmatprep.subr.bf16.mxu0 0
    %561 = vmatpush1.bf16.msra.mxu0 0
    %562 = vmatprep.mubr.bf16.mxu0 0
    %563 = vmatmul.mubr.bf16.gmra.mrb[0].mxu0 %v463
    %v564 = vpop.f32.mrb[0].mxu0
    %v565 = vadd.f32 %v481, %v564
    %v566 = vpop.f32.mrb[0].mxu0
    %v567 = vpop.f32.mrb[0].mxu0
    %v568 = vpop.f32.mrb[0].mxu0
    %569 = vdwg.mxu0
    %v570 = vmax.f32 %v565, 0.0
    %v571 = vpack.c.bf16 %v570, %v570
    %s572 = scalar_lea.vmem [#allocation7], 256
    %v573 = vld [vmem:[%s572] sm:$0xf]
    %v574 = vld [vmem:[%s572 + $0x4] sm:$0xf]
    %v575 = vld [vmem:[%s572 + $0x8] sm:$0xf]
    %v576 = vld [vmem:[%s572 + $0xc] sm:$0xf]
    %v577 = vld [vmem:[%s572 + $0x10] sm:$0xf]
    %v578 = vld [vmem:[%s572 + $0x14] sm:$0xf]
    %v579 = vld [vmem:[%s572 + $0x18] sm:$0xf]
    %v580 = vld [vmem:[%s572 + $0x1c] sm:$0xf]
    %v581 = vld [vmem:[%s572 + $0x20] sm:$0xf]
    %v582 = vld [vmem:[%s572 + $0x24] sm:$0xf]
    %v583 = vld [vmem:[%s572 + $0x28] sm:$0xf]
    %v584 = vld [vmem:[%s572 + $0x2c] sm:$0xf]
    %v585 = vld [vmem:[%s572 + $0x30] sm:$0xf]
    %v586 = vld [vmem:[%s572 + $0x34] sm:$0xf]
    %v587 = vld [vmem:[%s572 + $0x38] sm:$0xf]
    %v588 = vld [vmem:[%s572 + $0x3c] sm:$0xf]
    %v589 = vld [vmem:[#allocation10 + $0x5] ss:$0 sm:$0xff]
    %v606 = vunpack.c.l.b16 %v573
    %v607 = vunpack.c.l.b16 %v574
    %v608 = vunpack.c.l.b16 %v575
    %v609 = vunpack.c.l.b16 %v576
    %v610 = vunpack.c.l.b16 %v577
    %v611 = vunpack.c.l.b16 %v578
    %v612 = vunpack.c.l.b16 %v579
    %v613 = vunpack.c.l.b16 %v580
    %v614 = vunpack.c.l.b16 %v581
    %v615 = vunpack.c.l.b16 %v582
    %v616 = vunpack.c.l.b16 %v583
    %v617 = vunpack.c.l.b16 %v584
    %v618 = vunpack.c.l.b16 %v585
    %v619 = vunpack.c.l.b16 %v586
    %v620 = vunpack.c.l.b16 %v587
    %v621 = vunpack.c.l.b16 %v588
    %v622 = vpack.c.b16 %v607, %v606
    %v623 = vpack.c.b16 %v609, %v608
    %v624 = vpack.c.b16 %v611, %v610
    %v625 = vpack.c.b16 %v613, %v612
    %v626 = vpack.c.b16 %v615, %v614
    %v627 = vpack.c.b16 %v617, %v616
    %v628 = vpack.c.b16 %v619, %v618
    %v629 = vpack.c.b16 %v621, %v620
    %638 = vmatprep.subr.bf16.mxu0 0
    %639 = vmatpush1.bf16.msra.mxu0 %v622
    %640 = vmatprep.subr.bf16.mxu0 0
    %641 = vmatpush1.bf16.msra.mxu0 %v623
    %642 = vmatprep.subr.bf16.mxu0 0
    %643 = vmatpush1.bf16.msra.mxu0 %v624
    %644 = vmatprep.subr.bf16.mxu0 0
    %645 = vmatpush1.bf16.msra.mxu0 %v625
    %646 = vmatprep.subr.bf16.mxu0 0
    %647 = vmatpush1.bf16.msra.mxu0 %v626
    %648 = vmatprep.subr.bf16.mxu0 0
    %649 = vmatpush1.bf16.msra.mxu0 %v627
    %650 = vmatprep.subr.bf16.mxu0 0
    %651 = vmatpush1.bf16.msra.mxu0 %v628
    %652 = vmatprep.subr.bf16.mxu0 0
    %653 = vmatpush1.bf16.msra.mxu0 %v629
    %654 = vmatprep.subr.bf16.mxu0 0
    %655 = vmatpush1.bf16.msra.mxu0 0
    %656 = vmatprep.subr.bf16.mxu0 0
    %657 = vmatpush1.bf16.msra.mxu0 0
    %658 = vmatprep.subr.bf16.mxu0 0
    %659 = vmatpush1.bf16.msra.mxu0 0
    %660 = vmatprep.subr.bf16.mxu0 0
    %661 = vmatpush1.bf16.msra.mxu0 0
    %662 = vmatprep.subr.bf16.mxu0 0
    %663 = vmatpush1.bf16.msra.mxu0 0
    %664 = vmatprep.subr.bf16.mxu0 0
    %665 = vmatpush1.bf16.msra.mxu0 0
    %666 = vmatprep.subr.bf16.mxu0 0
    %667 = vmatpush1.bf16.msra.mxu0 0
    %668 = vmatprep.subr.bf16.mxu0 0
    %669 = vmatpush1.bf16.msra.mxu0 0
    %670 = vmatprep.mubr.bf16.mxu0 0
    %671 = vmatmul.mubr.bf16.gmra.mrb[0].mxu0 %v571
    %v672 = vpop.f32.mrb[0].mxu0
    %v673 = vadd.f32 %v589, %v672
    %v674 = vpop.f32.mrb[0].mxu0
    %v675 = vpop.f32.mrb[0].mxu0
    %v676 = vpop.f32.mrb[0].mxu0
    %677 = vdwg.mxu0
    %v678 = vmax.f32 %v673, 0.0
    %v679 = vpack.c.bf16 %v678, %v678
    %s680 = scalar_lea.vmem [#allocation7], 320
    %v681 = vld [vmem:[%s680] sm:$0xf]
    %v682 = vld [vmem:[%s680 + $0x4] sm:$0xf]
    %v683 = vld [vmem:[%s680 + $0x8] sm:$0xf]
    %v684 = vld [vmem:[%s680 + $0xc] sm:$0xf]
    %v685 = vld [vmem:[%s680 + $0x10] sm:$0xf]
    %v686 = vld [vmem:[%s680 + $0x14] sm:$0xf]
    %v687 = vld [vmem:[%s680 + $0x18] sm:$0xf]
    %v688 = vld [vmem:[%s680 + $0x1c] sm:$0xf]
    %v689 = vld [vmem:[%s680 + $0x20] sm:$0xf]
    %v690 = vld [vmem:[%s680 + $0x24] sm:$0xf]
    %v691 = vld [vmem:[%s680 + $0x28] sm:$0xf]
    %v692 = vld [vmem:[%s680 + $0x2c] sm:$0xf]
    %v693 = vld [vmem:[%s680 + $0x30] sm:$0xf]
    %v694 = vld [vmem:[%s680 + $0x34] sm:$0xf]
    %v695 = vld [vmem:[%s680 + $0x38] sm:$0xf]
    %v696 = vld [vmem:[%s680 + $0x3c] sm:$0xf]
    %v697 = vld [vmem:[#allocation10 + $0x6] ss:$0 sm:$0xff]
    %v714 = vunpack.c.l.b16 %v681
    %v715 = vunpack.c.l.b16 %v682
    %v716 = vunpack.c.l.b16 %v683
    %v717 = vunpack.c.l.b16 %v684
    %v718 = vunpack.c.l.b16 %v685
    %v719 = vunpack.c.l.b16 %v686
    %v720 = vunpack.c.l.b16 %v687
    %v721 = vunpack.c.l.b16 %v688
    %v722 = vunpack.c.l.b16 %v689
    %v723 = vunpack.c.l.b16 %v690
    %v724 = vunpack.c.l.b16 %v691
    %v725 = vunpack.c.l.b16 %v692
    %v726 = vunpack.c.l.b16 %v693
    %v727 = vunpack.c.l.b16 %v694
    %v728 = vunpack.c.l.b16 %v695
    %v729 = vunpack.c.l.b16 %v696
    %v730 = vpack.c.b16 %v715, %v714
    %v731 = vpack.c.b16 %v717, %v716
    %v732 = vpack.c.b16 %v719, %v718
    %v733 = vpack.c.b16 %v721, %v720
    %v734 = vpack.c.b16 %v723, %v722
    %v735 = vpack.c.b16 %v725, %v724
    %v736 = vpack.c.b16 %v727, %v726
    %v737 = vpack.c.b16 %v729, %v728
    %746 = vmatprep.subr.bf16.mxu0 0
    %747 = vmatpush1.bf16.msra.mxu0 %v730
    %748 = vmatprep.subr.bf16.mxu0 0
    %749 = vmatpush1.bf16.msra.mxu0 %v731
    %750 = vmatprep.subr.bf16.mxu0 0
    %751 = vmatpush1.bf16.msra.mxu0 %v732
    %752 = vmatprep.subr.bf16.mxu0 0
    %753 = vmatpush1.bf16.msra.mxu0 %v733
    %754 = vmatprep.subr.bf16.mxu0 0
    %755 = vmatpush1.bf16.msra.mxu0 %v734
    %756 = vmatprep.subr.bf16.mxu0 0
    %757 = vmatpush1.bf16.msra.mxu0 %v735
    %758 = vmatprep.subr.bf16.mxu0 0
    %759 = vmatpush1.bf16.msra.mxu0 %v736
    %760 = vmatprep.subr.bf16.mxu0 0
    %761 = vmatpush1.bf16.msra.mxu0 %v737
    %762 = vmatprep.subr.bf16.mxu0 0
    %763 = vmatpush1.bf16.msra.mxu0 0
    %764 = vmatprep.subr.bf16.mxu0 0
    %765 = vmatpush1.bf16.msra.mxu0 0
    %766 = vmatprep.subr.bf16.mxu0 0
    %767 = vmatpush1.bf16.msra.mxu0 0
    %768 = vmatprep.subr.bf16.mxu0 0
    %769 = vmatpush1.bf16.msra.mxu0 0
    %770 = vmatprep.subr.bf16.mxu0 0
    %771 = vmatpush1.bf16.msra.mxu0 0
    %772 = vmatprep.subr.bf16.mxu0 0
    %773 = vmatpush1.bf16.msra.mxu0 0
    %774 = vmatprep.subr.bf16.mxu0 0
    %775 = vmatpush1.bf16.msra.mxu0 0
    %776 = vmatprep.subr.bf16.mxu0 0
    %777 = vmatpush1.bf16.msra.mxu0 0
    %778 = vmatprep.mubr.bf16.mxu0 0
    %779 = vmatmul.mubr.bf16.gmra.mrb[0].mxu0 %v679
    %v780 = vpop.f32.mrb[0].mxu0
    %v781 = vadd.f32 %v697, %v780
    %v782 = vpop.f32.mrb[0].mxu0
    %v783 = vpop.f32.mrb[0].mxu0
    %v784 = vpop.f32.mrb[0].mxu0
    %785 = vdwg.mxu0
    %v786 = vmax.f32 %v781, 0.0
    %v787 = vpack.c.bf16 %v786, %v786
    %v788 = vld [vmem:[#allocation8] sm:$0xff]
    %v789 = vld [vmem:[#allocation8 + $0x8] sm:$0xff]
    %v790 = vld [vmem:[#allocation8 + $0x10] sm:$0xff]
    %v791 = vld [vmem:[#allocation8 + $0x18] sm:$0xff]
    %v792 = vld [vmem:[#allocation8 + $0x20] sm:$0xff]
    %v793 = vld [vmem:[#allocation8 + $0x28] sm:$0xff]
    %v794 = vld [vmem:[#allocation8 + $0x30] sm:$0xff]
    %v795 = vld [vmem:[#allocation8 + $0x38] sm:$0xff]
    %v796 = vld [vmem:[#allocation8 + $0x40] sm:$0xff]
    %v797 = vld [vmem:[#allocation8 + $0x48] sm:$0xff]
    %v798 = vld [vmem:[#allocation8 + $0x50] sm:$0xff]
    %v799 = vld [vmem:[#allocation8 + $0x58] sm:$0xff]
    %v800 = vld [vmem:[#allocation8 + $0x60] sm:$0xff]
    %v801 = vld [vmem:[#allocation8 + $0x68] sm:$0xff]
    %v802 = vld [vmem:[#allocation8 + $0x70] sm:$0xff]
    %v803 = vld [vmem:[#allocation8 + $0x78] sm:$0xff]
    %s804 = scalar_lea.vmem [#allocation10], 7
    %v805 = vld [vmem:[%s804] ss:$8 sm:$0x3]
    %v807 = vlaneseq
    %v808 = vshrl.u32 %v807, 7
    %v809 = vsub.s32 0, %v808
    %v810 = vrot.slane %v805, %v809
    %v811 = vlaneseq
    %v812 = vshrl.u32 %v811, 7
    %v813 = vsub.s32 1, %v812
    %v814 = vrot.slane %v805, %v813
    %v833 = vunpack.c.l.b16 %v788
    %v834 = vunpack.c.h.b16 %v788
    %v835 = vunpack.c.l.b16 %v789
    %v836 = vunpack.c.h.b16 %v789
    %v837 = vunpack.c.l.b16 %v790
    %v838 = vunpack.c.h.b16 %v790
    %v839 = vunpack.c.l.b16 %v791
    %v840 = vunpack.c.h.b16 %v791
    %v841 = vunpack.c.l.b16 %v792
    %v842 = vunpack.c.h.b16 %v792
    %v843 = vunpack.c.l.b16 %v793
    %v844 = vunpack.c.h.b16 %v793
    %v845 = vunpack.c.l.b16 %v794
    %v846 = vunpack.c.h.b16 %v794
    %v847 = vunpack.c.l.b16 %v795
    %v848 = vunpack.c.h.b16 %v795
    %v849 = vunpack.c.l.b16 %v796
    %v850 = vunpack.c.h.b16 %v796
    %v851 = vunpack.c.l.b16 %v797
    %v852 = vunpack.c.h.b16 %v797
    %v853 = vunpack.c.l.b16 %v798
    %v854 = vunpack.c.h.b16 %v798
    %v855 = vunpack.c.l.b16 %v799
    %v856 = vunpack.c.h.b16 %v799
    %v857 = vunpack.c.l.b16 %v800
    %v858 = vunpack.c.h.b16 %v800
    %v859 = vunpack.c.l.b16 %v801
    %v860 = vunpack.c.h.b16 %v801
    %v861 = vunpack.c.l.b16 %v802
    %v862 = vunpack.c.h.b16 %v802
    %v863 = vunpack.c.l.b16 %v803
    %v864 = vunpack.c.h.b16 %v803
    %v865 = vpack.c.b16 %v835, %v833
    %v866 = vpack.c.b16 %v836, %v834
    %v867 = vpack.c.b16 %v839, %v837
    %v868 = vpack.c.b16 %v840, %v838
    %v869 = vpack.c.b16 %v843, %v841
    %v870 = vpack.c.b16 %v844, %v842
    %v871 = vpack.c.b16 %v847, %v845
    %v872 = vpack.c.b16 %v848, %v846
    %v873 = vpack.c.b16 %v851, %v849
    %v874 = vpack.c.b16 %v852, %v850
    %v875 = vpack.c.b16 %v855, %v853
    %v876 = vpack.c.b16 %v856, %v854
    %v877 = vpack.c.b16 %v859, %v857
    %v878 = vpack.c.b16 %v860, %v858
    %v879 = vpack.c.b16 %v863, %v861
    %v880 = vpack.c.b16 %v864, %v862
    %897 = vmatprep.subr.bf16.mxu0 %v866
    %898 = vmatpush1.bf16.msra.mxu0 %v865
    %899 = vmatprep.subr.bf16.mxu0 %v868
    %900 = vmatpush1.bf16.msra.mxu0 %v867
    %901 = vmatprep.subr.bf16.mxu0 %v870
    %902 = vmatpush1.bf16.msra.mxu0 %v869
    %903 = vmatprep.subr.bf16.mxu0 %v872
    %904 = vmatpush1.bf16.msra.mxu0 %v871
    %905 = vmatprep.subr.bf16.mxu0 %v874
    %906 = vmatpush1.bf16.msra.mxu0 %v873
    %907 = vmatprep.subr.bf16.mxu0 %v876
    %908 = vmatpush1.bf16.msra.mxu0 %v875
    %909 = vmatprep.subr.bf16.mxu0 %v878
    %910 = vmatpush1.bf16.msra.mxu0 %v877
    %911 = vmatprep.subr.bf16.mxu0 %v880
    %912 = vmatpush1.bf16.msra.mxu0 %v879
    %913 = vmatprep.subr.bf16.mxu0 0
    %914 = vmatpush1.bf16.msra.mxu0 0
    %915 = vmatprep.subr.bf16.mxu0 0
    %916 = vmatpush1.bf16.msra.mxu0 0
    %917 = vmatprep.subr.bf16.mxu0 0
    %918 = vmatpush1.bf16.msra.mxu0 0
    %919 = vmatprep.subr.bf16.mxu0 0
    %920 = vmatpush1.bf16.msra.mxu0 0
    %921 = vmatprep.subr.bf16.mxu0 0
    %922 = vmatpush1.bf16.msra.mxu0 0
    %923 = vmatprep.subr.bf16.mxu0 0
    %924 = vmatpush1.bf16.msra.mxu0 0
    %925 = vmatprep.subr.bf16.mxu0 0
    %926 = vmatpush1.bf16.msra.mxu0 0
    %927 = vmatprep.subr.bf16.mxu0 0
    %928 = vmatpush1.bf16.msra.mxu0 0
    %929 = vmatprep.mubr.bf16.mxu0 0
    %930 = vmatmul.mubr.bf16.gmra.mrb[0].mxu0 %v787
    %v931 = vpop.f32.mrb[0].mxu0
    %v932 = vadd.f32 %v810, %v931
    %v933 = vpop.f32.mrb[0].mxu0
    %v934 = vadd.f32 %v814, %v933
    %v935 = vpop.f32.mrb[0].mxu0
    %v936 = vpop.f32.mrb[0].mxu0
    %937 = vdwg.mxu0
    %938 = vst [vmem:[#allocation11] sm:$0xff] %v932
    %v939 = vmax.f32 %v934, -20.0
    %v940 = vmin.f32 %v939, 2.0
    %941 = vst [vmem:[#allocation11 + $0x8] sm:$0xff] %v940
    // Predicated region
    $region42: #{tpu_custom_call.1} parent=1 // pred_check
      _
    $region43: #{tpu_custom_call.1} parent=1 // pred_check_branch
      %943 = sbr.rel (0) target = $region45
    $region44: #{tpu_custom_call.1} parent=1 // pred_region
      %s945 = ssub.s32 256, 256
      %946 = vsyncadd [#allocation4], %s945
      %s948 = sshll.u32 [#allocation11], 4
      %s949 = int_to_ptr.vmem [resolvable:$true] %s948
      %951 = dma.vmem_to_hbm [thread:$0]  %s949, 256, %s5, [#allocation4]
    $region45: #{tpu_custom_call.1} parent=1 // pred_fallthru
      _
    // Predicated region
    $region46: #{tpu_custom_call.1} parent=1 // pred_check
      _
    $region47: #{tpu_custom_call.1} parent=1 // pred_check_branch
      %953 = sbr.rel (0) target = $region49
    $region48: #{tpu_custom_call.1} parent=1 // pred_region
      %954 = dma.done [#allocation4], 256
    $region49: #{tpu_custom_call.1} parent=1 // pred_fallthru
      _
    %955 = vsyncpa [#allocation3], 1
    %956 = vsyncpa [#allocation6], 1
    %957 = vsyncpa [#allocation9], 1
    %958 = vsyncpa [#allocation4], 1

</llo_original>
